<compile_context>
chip_gen: v7x
topology: tpu7x:2x2x1
jax: 0.10.0
libtpu: 0.0.40
codegen_flags: <defaults>
</compile_context>

<pallas_src>
import math

import jax
import jax.numpy as jnp
from jax.experimental import pallas as pl
from jax.experimental.pallas import tpu as pltpu


def _round_up(x, m):
    return ((x + m - 1) // m) * m


def categorical_net_kernel(x_ref, w1_ref, b1_ref, w2_ref, b2_ref,
                           logits_ref, lse_ref):
    # Linear 1 (MXU, bf16 operands, f32 accumulate) + bias + ELU (f32).
    h = jnp.dot(x_ref[...], w1_ref[...],
                preferred_element_type=jnp.float32) + b1_ref[...]
    h = jnp.where(h > 0, h, jnp.exp(jnp.minimum(h, 0.0)) - 1.0)   # ELU, alpha=1.0

    # Linear 2 (MXU). Padded output lanes carry bias -1e30 so they never win the softmax.
    logits = jnp.dot(h.astype(jnp.bfloat16), w2_ref[...],
                     preferred_element_type=jnp.float32) + b2_ref[...]
    logits_ref[...] = logits

    # logsumexp over the class axis (padded lanes underflow to exp(...) == 0).
    m = jnp.max(logits, axis=-1, keepdims=True)
    lse_ref[...] = m + jnp.log(jnp.sum(jnp.exp(logits - m), axis=-1, keepdims=True))


def categorical_network(x, w1, b1, w2, b2, *, tile_b=128):
    """Forward pass of CategoricalNetwork. Returns (logits, log_probs)."""
    B, in_dim = x.shape
    hidden = w1.shape[1]
    out_dim = w2.shape[1]

    # --- lane-dense class padding (multiple of 128) --------------------------------
    out_pad = _round_up(out_dim, 128)
    w2p = jnp.zeros((hidden, out_pad), jnp.float32).at[:, :out_dim].set(w2)
    b2p = jnp.full((1, out_pad), -1e30, jnp.float32).at[:, :out_dim].set(b2)

    # --- batch tiling ---------------------------------------------------------------
    tile_b = min(tile_b, _round_up(B, 8))
    b_pad = _round_up(B, tile_b)
    if b_pad != B:
        x = jnp.pad(x, ((0, b_pad - B), (0, 0)))
    grid = (b_pad // tile_b,)

    # bf16 MXU operands (cast once here, not per grid step). Biases stay f32.
    x_bf = x.astype(jnp.bfloat16)
    w1_bf = w1.astype(jnp.bfloat16)
    w2p_bf = w2p.astype(jnp.bfloat16)
    b1_f32 = b1.astype(jnp.float32)

    vmem = pltpu.MemorySpace.VMEM
    flops = 2 * b_pad * in_dim * hidden + 2 * b_pad * hidden * out_pad
    bytes_accessed = (x_bf.size * 2 + w1_bf.size * 2 + w2p_bf.size * 2
                      + b1_f32.size * 4 + b2p.size * 4
                      + b_pad * out_pad * 4 + b_pad * 4)

    logits_pad, lse = pl.pallas_call(
        categorical_net_kernel,
        out_shape=(
            jax.ShapeDtypeStruct((b_pad, out_pad), jnp.float32),
            jax.ShapeDtypeStruct((b_pad, 1), jnp.float32),
        ),
        grid=grid,
        in_specs=[
            pl.BlockSpec((tile_b, in_dim), lambda i: (i, 0), memory_space=vmem),
            pl.BlockSpec((in_dim, hidden), lambda i: (0, 0), memory_space=vmem),
            pl.BlockSpec((1, hidden), lambda i: (0, 0), memory_space=vmem),
            pl.BlockSpec((hidden, out_pad), lambda i: (0, 0), memory_space=vmem),
            pl.BlockSpec((1, out_pad), lambda i: (0, 0), memory_space=vmem),
        ],
        out_specs=(
            pl.BlockSpec((tile_b, out_pad), lambda i: (i, 0), memory_space=vmem),
            pl.BlockSpec((tile_b, 1), lambda i: (i, 0), memory_space=vmem),
        ),
        compiler_params=pltpu.CompilerParams(
            dimension_semantics=("parallel",),
            vmem_limit_bytes=32 * 1024 * 1024,
        ),
        cost_estimate=pl.CostEstimate(
            flops=flops,
            transcendentals=b_pad * (hidden + out_pad),
            bytes_accessed=bytes_accessed,
        ),
    )(x_bf, w1_bf, b1_f32, w2p_bf, b2p)

    logits = logits_pad[:B, :out_dim]
    logp = logits - lse[:B]
    # The OneHotCategorical distribution is fully characterized by these logits.
    # TODO(synk): one-hot sampling from the distribution is not done in-kernel.
    return logits, logp


def init_linear(key, fan_in, fan_out):
    # Deterministic init mimicking PyTorch nn.Linear default (uniform +/- 1/sqrt(fan_in)).
    kw, kb = jax.random.split(key)
    bound = 1.0 / math.sqrt(fan_in)
    w = jax.random.uniform(kw, (fan_in, fan_out), jnp.float32, -bound, bound)
    b = jax.random.uniform(kb, (1, fan_out), jnp.float32, -bound, bound)
    return w, b


if __name__ == "__main__":
    key = jax.random.PRNGKey(0)
    k_x, k_l1, k_l2 = jax.random.split(key, 3)

    B, in_dim, out_dim = 200, 32, 16     # B=200 exercises batch padding & a 2-step grid
    hidden_dim = in_dim                  # module default: hidden_dim = in_dim

    x = jax.random.normal(k_x, (B, in_dim), jnp.float32)
    w1, b1 = init_linear(k_l1, in_dim, hidden_dim)
    w2, b2 = init_linear(k_l2, hidden_dim, out_dim)

    logits, logp = categorical_network(x, w1, b1, w2, b2, tile_b=128)
    jax.block_until_ready((logits, logp))

    # Pure-JAX reference with the same bf16-operand / f32-accumulate matmuls.
    h_ref = jnp.dot(x.astype(jnp.bfloat16), w1.astype(jnp.bfloat16),
                    preferred_element_type=jnp.float32) + b1
    h_ref = jnp.where(h_ref > 0, h_ref, jnp.exp(jnp.minimum(h_ref, 0.0)) - 1.0)
    logits_ref = jnp.dot(h_ref.astype(jnp.bfloat16), w2.astype(jnp.bfloat16),
                         preferred_element_type=jnp.float32) + b2
    logp_ref = jax.nn.log_softmax(logits_ref, axis=-1)

    assert logits.shape == (B, out_dim) and logp.shape == (B, out_dim)
    assert jnp.allclose(logits, logits_ref, atol=2e-3, rtol=2e-3)
    assert jnp.allclose(logp, logp_ref, atol=2e-3, rtol=2e-3)
    assert jnp.allclose(jnp.exp(logp).sum(-1), 1.0, atol=1e-5)

    print("KERNEL_OK")
</pallas_src>

<mosaic_0001>
module attributes {stable_mosaic.version = 11 : i64} {
  func.func @categorical_net_kernel(%arg0: i32, %arg1: memref<128x32xbf16, #tpu.memory_space<vmem>>, %arg2: memref<32x32xbf16, #tpu.memory_space<vmem>>, %arg3: memref<1x32xf32, #tpu.memory_space<vmem>>, %arg4: memref<32x128xbf16, #tpu.memory_space<vmem>>, %arg5: memref<1x128xf32, #tpu.memory_space<vmem>>, %arg6: memref<128x128xf32, #tpu.memory_space<vmem>>, %arg7: memref<128x1xf32, #tpu.memory_space<vmem>>) attributes {dimension_semantics = [#tpu.dimension_semantics<parallel>], iteration_bounds = array<i64: 2>, scalar_prefetch = 0 : i64, scratch_operands = 0 : i64, tpu.core_type = #tpu.core_type<tc>, window_params = [{transform_indices = @transform_0, window_bounds = array<i64: 128, 32>}, {pipeline_mode = #tpu.pipeline_mode<synchronous>, transform_indices = @transform_1, window_bounds = array<i64: 32, 32>}, {pipeline_mode = #tpu.pipeline_mode<synchronous>, transform_indices = @transform_2, window_bounds = array<i64: 1, 32>}, {pipeline_mode = #tpu.pipeline_mode<synchronous>, transform_indices = @transform_3, window_bounds = array<i64: 32, 128>}, {pipeline_mode = #tpu.pipeline_mode<synchronous>, transform_indices = @transform_4, window_bounds = array<i64: 1, 128>}, {transform_indices = @transform_5, window_bounds = array<i64: 128, 128>}, {transform_indices = @transform_6, window_bounds = array<i64: 128, 1>}]} {
    %c0 = arith.constant 0 : index
    %c0_0 = arith.constant 0 : index
    %0 = vector.load %arg1[%c0, %c0_0] : memref<128x32xbf16, #tpu.memory_space<vmem>>, vector<128x32xbf16>
    %c0_1 = arith.constant 0 : index
    %c0_2 = arith.constant 0 : index
    %1 = vector.load %arg2[%c0_1, %c0_2] : memref<32x32xbf16, #tpu.memory_space<vmem>>, vector<32x32xbf16>
    %cst = arith.constant dense<0.000000e+00> : vector<128x32xf32>
    %2 = tpu.matmul %0, %1, %cst {dimension_numbers = #tpu.dot_dimension_numbers<[1], [0], [0], [1], [0, 0, 1, 1], [], []>} : vector<128x32xbf16>, vector<32x32xbf16>, vector<128x32xf32> -> vector<128x32xf32>
    %c0_3 = arith.constant 0 : index
    %c0_4 = arith.constant 0 : index
    %3 = vector.load %arg3[%c0_3, %c0_4] : memref<1x32xf32, #tpu.memory_space<vmem>>, vector<1x32xf32>
    %4 = vector.broadcast %3 : vector<1x32xf32> to vector<128x32xf32>
    %5 = arith.addf %2, %4 : vector<128x32xf32>
    %cst_5 = arith.constant 0.000000e+00 : f32
    %6 = vector.broadcast %cst_5 : f32 to vector<128x32xf32>
    %7 = arith.cmpf ogt, %5, %6 : vector<128x32xf32>
    %cst_6 = arith.constant 0.000000e+00 : f32
    %8 = vector.broadcast %cst_6 : f32 to vector<128x32xf32>
    %9 = arith.minimumf %5, %8 : vector<128x32xf32>
    %10 = math.exp %9 : vector<128x32xf32>
    %cst_7 = arith.constant 1.000000e+00 : f32
    %11 = vector.broadcast %cst_7 : f32 to vector<128x32xf32>
    %12 = arith.subf %10, %11 : vector<128x32xf32>
    %13 = arith.select %7, %5, %12 : vector<128x32xi1>, vector<128x32xf32>
    %14 = arith.truncf %13 : vector<128x32xf32> to vector<128x32xbf16>
    %c0_8 = arith.constant 0 : index
    %c0_9 = arith.constant 0 : index
    %15 = vector.load %arg4[%c0_8, %c0_9] : memref<32x128xbf16, #tpu.memory_space<vmem>>, vector<32x128xbf16>
    %cst_10 = arith.constant dense<0.000000e+00> : vector<128x128xf32>
    %16 = tpu.matmul %14, %15, %cst_10 {dimension_numbers = #tpu.dot_dimension_numbers<[1], [0], [0], [1], [0, 0, 1, 1], [], []>} : vector<128x32xbf16>, vector<32x128xbf16>, vector<128x128xf32> -> vector<128x128xf32>
    %c0_11 = arith.constant 0 : index
    %c0_12 = arith.constant 0 : index
    %17 = vector.load %arg5[%c0_11, %c0_12] : memref<1x128xf32, #tpu.memory_space<vmem>>, vector<1x128xf32>
    %18 = vector.broadcast %17 : vector<1x128xf32> to vector<128x128xf32>
    %19 = arith.addf %16, %18 : vector<128x128xf32>
    %c0_13 = arith.constant 0 : index
    %c0_14 = arith.constant 0 : index
    %20 = vector.load %arg6[%c0_13, %c0_14] : memref<128x128xf32, #tpu.memory_space<vmem>>, vector<128x128xf32>
    tpu.vector_store %arg6[%c0_13, %c0_14], %19 {strides = array<i32>} : memref<128x128xf32, #tpu.memory_space<vmem>>, vector<128x128xf32>,
    %cst_15 = arith.constant dense<0xFF800000> : vector<128xf32>
    %21 = vector.multi_reduction <maximumf>, %19, %cst_15 [1] : vector<128x128xf32> to vector<128xf32>
    %22 = vector.shape_cast %21 : vector<128xf32> to vector<128x1xf32>
    %23 = vector.broadcast %22 : vector<128x1xf32> to vector<128x128xf32>
    %24 = arith.subf %19, %23 : vector<128x128xf32>
    %25 = math.exp %24 : vector<128x128xf32>
    %cst_16 = arith.constant dense<0.000000e+00> : vector<128xf32>
    %26 = vector.multi_reduction <add>, %25, %cst_16 [1] : vector<128x128xf32> to vector<128xf32>
    %27 = vector.shape_cast %26 : vector<128xf32> to vector<128x1xf32>
    %28 = math.log %27 : vector<128x1xf32>
    %29 = arith.addf %22, %28 : vector<128x1xf32>
    %c0_17 = arith.constant 0 : index
    %c0_18 = arith.constant 0 : index
    %30 = vector.load %arg7[%c0_17, %c0_18] : memref<128x1xf32, #tpu.memory_space<vmem>>, vector<128x1xf32>
    tpu.vector_store %arg7[%c0_17, %c0_18], %29 {strides = array<i32>} : memref<128x1xf32, #tpu.memory_space<vmem>>, vector<128x1xf32>,
    return
  }
  func.func @transform_0(%arg0: i32) -> (i32, i32) {
    %c0_i32 = arith.constant 0 : i32
    %c0_i32_0 = arith.constant 0 : i32
    return %arg0, %c0_i32 : i32, i32
  }
  func.func @transform_1(%arg0: i32) -> (i32, i32) {
    %c0_i32 = arith.constant 0 : i32
    %c0_i32_0 = arith.constant 0 : i32
    %c0_i32_1 = arith.constant 0 : i32
    return %c0_i32, %c0_i32_0 : i32, i32
  }
  func.func @transform_2(%arg0: i32) -> (i32, i32) {
    %c0_i32 = arith.constant 0 : i32
    %c0_i32_0 = arith.constant 0 : i32
    %c0_i32_1 = arith.constant 0 : i32
    return %c0_i32, %c0_i32_0 : i32, i32
  }
  func.func @transform_3(%arg0: i32) -> (i32, i32) {
    %c0_i32 = arith.constant 0 : i32
    %c0_i32_0 = arith.constant 0 : i32
    %c0_i32_1 = arith.constant 0 : i32
    return %c0_i32, %c0_i32_0 : i32, i32
  }
  func.func @transform_4(%arg0: i32) -> (i32, i32) {
    %c0_i32 = arith.constant 0 : i32
    %c0_i32_0 = arith.constant 0 : i32
    %c0_i32_1 = arith.constant 0 : i32
    return %c0_i32, %c0_i32_0 : i32, i32
  }
  func.func @transform_5(%arg0: i32) -> (i32, i32) {
    %c0_i32 = arith.constant 0 : i32
    %c0_i32_0 = arith.constant 0 : i32
    return %arg0, %c0_i32 : i32, i32
  }
  func.func @transform_6(%arg0: i32) -> (i32, i32) {
    %c0_i32 = arith.constant 0 : i32
    %c0_i32_0 = arith.constant 0 : i32
    return %arg0, %c0_i32 : i32, i32
  }
}

</mosaic_0001>

<llo_original>
// kernel: tpu_custom_call.1
$region0: #{tpu_custom_call.1}
  #allocation0 [shape = 'u32[]', space=smem, size = 0x4, offset = 0x4, fixed_abs, tag = 'smem constant byte address 0x4 - core index']
  #allocation1 [shape = 'u32[144,128]{1,0:T(1,128)}', space=vmem, size = 0x12000, scoped, tag = 'internal scratch']
  %s0 = inlined_call_operand.vmem [shape: bf16[256,32], index: 0, kind: input, shape index: {}]
  %s1 = inlined_call_operand.vmem [shape: bf16[32,32], index: 1, kind: input, shape index: {}]
  %s2 = inlined_call_operand.vmem [shape: f32[1,32], index: 2, kind: input, shape index: {}]
  %s3 = inlined_call_operand.vmem [shape: bf16[32,128], index: 3, kind: input, shape index: {}]
  %s4 = inlined_call_operand.vmem [shape: f32[1,128], index: 4, kind: input, shape index: {}]
  %s5 = inlined_call_operand.hbm [shape: f32[256,128], index: 5, kind: output, shape index: {0}]
  %s6 = inlined_call_operand.vmem [shape: f32[256,1], index: 6, kind: output, shape index: {1}]
  %7 = xla_tuple %s5, %s6
  %s8 = sld [smem:[#allocation0]]
  $region61: #{tpu_custom_call.1} parent=0
    _
  %s10 = ssub.s32 1, %s8
  %s11 = scalar_select 0, %s10, %s8
  $region1: #{tpu_custom_call.1} parent=0
    #allocation2 [shape = 'u8[131072]{0}', space=vmem, size = 0x20000, scoped, tag = 'output window, operand 0']
    #allocation3 [shape = 's32[2]{0}', space=sflag, size = 0x8, scoped, tag = 'scoped memory for tpu_custom_call.1']
    %12 = vsyncpa [#allocation3], 0
    %s13 = scalar_lea.sflag [#allocation3], 1
    %14 = vsyncpa %s13, 0
    loop: start=0, step=1, limit=4
    $region2: #{tpu_custom_call.1} parent=1 // loop_pre_header
      _
    $region3: #{tpu_custom_call.1} parent=1 // loop_header
      %s16 = sphi 0, %s20
      %p17 = scmp.ge.s32.totalorder %s16, 4
      %s26 = sphi 0, %s28
      %s29 = sphi 0, %s26
      %s30 = sphi 0, %s29
      %s46 = sphi 0, %s30
      %s50 = sphi 0, %s50
      %s52 = sphi 0, %s50
      %s53 = sphi 0, %s52
      %s67 = sphi 0, %s53
      %s71 = sphi 0, %s71
      %s73 = sphi 0, %s71
      %s74 = sphi 0, %s73
      %s88 = sphi 0, %s74
      %s92 = sphi 0, %s92
      %s94 = sphi 0, %s92
      %s95 = sphi 0, %s94
      %s109 = sphi 0, %s95
      %s113 = sphi 0, %s113
      %s115 = sphi 0, %s113
      %s116 = sphi 0, %s115
      %s130 = sphi 0, %s116
      %s136 = sphi 0, %s138
      %s139 = sphi 0, %s136
      %s140 = sphi 0, %s139
      %s156 = sphi 0, %s140
      %s162 = sphi 0, %s164
      %s165 = sphi 0, %s162
      %s166 = sphi 0, %s165
      %s182 = sphi 0, %s166
    $region4: #{tpu_custom_call.1} parent=1 // loop_header_branch
      %19 = sbr.rel (%p17) target = $region8
    $region5: #{tpu_custom_call.1} parent=1 // loop_body
      %s21 = ssub.s32 %s16, 1
      %s22 = ssub.s32 %s16, 2
      %s23 = sadd.s32 %s16, 1
      %s24 = ssub.s32 %s16, %s23
      %p25 = scmp.eq.s32.totalorder %s24, 0
      %s27 = sadd.s32 %s26, 1
      %s28 = scalar_select %p25, %s26, %s27
      %p31 = pneg %p25
      %p32 = scmp.eq.s32.totalorder %s16, 1
      %p33 = por %p31, %p32
      %p34 = scmp.ne.s32.totalorder %s26, %s29
      %p35 = scmp.eq.s32.totalorder %s16, 0
      %p36 = por %p34, %p35
      %p37 = scmp.ne.s32.totalorder %s26, %s29
      %p38 = scmp.eq.s32.totalorder %s21, 1
      %p39 = por %p37, %p38
      %p40 = scmp.ne.s32.totalorder %s29, %s30
      %p41 = scmp.eq.s32.totalorder %s21, 0
      %p42 = por %p40, %p41
      %p43 = scmp.ne.s32.totalorder %s29, %s30
      %p44 = scmp.eq.s32.totalorder %s22, 1
      %p45 = por %p43, %p44
      %p47 = scmp.ne.s32.totalorder %s30, %s46
      %p48 = scmp.eq.s32.totalorder %s22, 0
      %p49 = por %p47, %p48
      %s51 = sadd.s32 %s50, 1
      %p54 = scmp.eq.s32.totalorder %s16, 1
      %p55 = scmp.ne.s32.totalorder %s50, %s52
      %p56 = scmp.eq.s32.totalorder %s16, 0
      %p57 = por %p55, %p56
      %p58 = scmp.ne.s32.totalorder %s50, %s52
      %p59 = scmp.eq.s32.totalorder %s21, 1
      %p60 = por %p58, %p59
      %p61 = scmp.ne.s32.totalorder %s52, %s53
      %p62 = scmp.eq.s32.totalorder %s21, 0
      %p63 = por %p61, %p62
      %p64 = scmp.ne.s32.totalorder %s52, %s53
      %p65 = scmp.eq.s32.totalorder %s22, 1
      %p66 = por %p64, %p65
      %p68 = scmp.ne.s32.totalorder %s53, %s67
      %p69 = scmp.eq.s32.totalorder %s22, 0
      %p70 = por %p68, %p69
      %s72 = sadd.s32 %s71, 1
      %p75 = scmp.eq.s32.totalorder %s16, 1
      %p76 = scmp.ne.s32.totalorder %s71, %s73
      %p77 = scmp.eq.s32.totalorder %s16, 0
      %p78 = por %p76, %p77
      %p79 = scmp.ne.s32.totalorder %s71, %s73
      %p80 = scmp.eq.s32.totalorder %s21, 1
      %p81 = por %p79, %p80
      %p82 = scmp.ne.s32.totalorder %s73, %s74
      %p83 = scmp.eq.s32.totalorder %s21, 0
      %p84 = por %p82, %p83
      %p85 = scmp.ne.s32.totalorder %s73, %s74
      %p86 = scmp.eq.s32.totalorder %s22, 1
      %p87 = por %p85, %p86
      %p89 = scmp.ne.s32.totalorder %s74, %s88
      %p90 = scmp.eq.s32.totalorder %s22, 0
      %p91 = por %p89, %p90
      %s93 = sadd.s32 %s92, 1
      %p96 = scmp.eq.s32.totalorder %s16, 1
      %p97 = scmp.ne.s32.totalorder %s92, %s94
      %p98 = scmp.eq.s32.totalorder %s16, 0
      %p99 = por %p97, %p98
      %p100 = scmp.ne.s32.totalorder %s92, %s94
      %p101 = scmp.eq.s32.totalorder %s21, 1
      %p102 = por %p100, %p101
      %p103 = scmp.ne.s32.totalorder %s94, %s95
      %p104 = scmp.eq.s32.totalorder %s21, 0
      %p105 = por %p103, %p104
      %p106 = scmp.ne.s32.totalorder %s94, %s95
      %p107 = scmp.eq.s32.totalorder %s22, 1
      %p108 = por %p106, %p107
      %p110 = scmp.ne.s32.totalorder %s95, %s109
      %p111 = scmp.eq.s32.totalorder %s22, 0
      %p112 = por %p110, %p111
      %s114 = sadd.s32 %s113, 1
      %p117 = scmp.eq.s32.totalorder %s16, 1
      %p118 = scmp.ne.s32.totalorder %s113, %s115
      %p119 = scmp.eq.s32.totalorder %s16, 0
      %p120 = por %p118, %p119
      %p121 = scmp.ne.s32.totalorder %s113, %s115
      %p122 = scmp.eq.s32.totalorder %s21, 1
      %p123 = por %p121, %p122
      %p124 = scmp.ne.s32.totalorder %s115, %s116
      %p125 = scmp.eq.s32.totalorder %s21, 0
      %p126 = por %p124, %p125
      %p127 = scmp.ne.s32.totalorder %s115, %s116
      %p128 = scmp.eq.s32.totalorder %s22, 1
      %p129 = por %p127, %p128
      %p131 = scmp.ne.s32.totalorder %s116, %s130
      %p132 = scmp.eq.s32.totalorder %s22, 0
      %p133 = por %p131, %p132
      %s134 = ssub.s32 %s16, %s23
      %p135 = scmp.eq.s32.totalorder %s134, 0
      %s137 = sadd.s32 %s136, 1
      %s138 = scalar_select %p135, %s136, %s137
      %p141 = pneg %p135
      %p142 = scmp.eq.s32.totalorder %s16, 1
      %p143 = por %p141, %p142
      %p144 = scmp.ne.s32.totalorder %s136, %s139
      %p145 = scmp.eq.s32.totalorder %s16, 0
      %p146 = por %p144, %p145
      %p147 = scmp.ne.s32.totalorder %s136, %s139
      %p148 = scmp.eq.s32.totalorder %s21, 1
      %p149 = por %p147, %p148
      %p150 = scmp.ne.s32.totalorder %s139, %s140
      %p151 = scmp.eq.s32.totalorder %s21, 0
      %p152 = por %p150, %p151
      %p153 = scmp.ne.s32.totalorder %s139, %s140
      %p154 = scmp.eq.s32.totalorder %s22, 1
      %p155 = por %p153, %p154
      %p157 = scmp.ne.s32.totalorder %s140, %s156
      %p158 = scmp.eq.s32.totalorder %s22, 0
      %p159 = por %p157, %p158
      %s160 = ssub.s32 %s16, %s23
      %p161 = scmp.eq.s32.totalorder %s160, 0
      %s163 = sadd.s32 %s162, 1
      %s164 = scalar_select %p161, %s162, %s163
      %p167 = pneg %p161
      %p168 = scmp.eq.s32.totalorder %s16, 1
      %p169 = por %p167, %p168
      %p170 = scmp.ne.s32.totalorder %s162, %s165
      %p171 = scmp.eq.s32.totalorder %s16, 0
      %p172 = por %p170, %p171
      %p173 = scmp.ne.s32.totalorder %s162, %s165
      %p174 = scmp.eq.s32.totalorder %s21, 1
      %p175 = por %p173, %p174
      %p176 = scmp.ne.s32.totalorder %s165, %s166
      %p177 = scmp.eq.s32.totalorder %s21, 0
      %p178 = por %p176, %p177
      %p179 = scmp.ne.s32.totalorder %s165, %s166
      %p180 = scmp.eq.s32.totalorder %s22, 1
      %p181 = por %p179, %p180
      %p183 = scmp.ne.s32.totalorder %s166, %s182
      %p184 = scmp.eq.s32.totalorder %s22, 0
      %p185 = por %p183, %p184
      %p186 = scmp.le.s32.totalorder 1, %s16
      %p187 = scmp.lt.s32.totalorder %s16, 3
      %p188 = pnand %p186, %p187
      %p189 = pneg %p188
      // Predicated region
      $region9: #{tpu_custom_call.1} parent=5 // pred_check
        _
      $region10: #{tpu_custom_call.1} parent=5 // pred_check_branch
        %191 = sbr.rel (%p188) target = $region12
      $region11: #{tpu_custom_call.1} parent=5 // pred_region
        %s192 = ssub.s32 %s16, 1
        // Predicated region
        $region13: #{tpu_custom_call.1} parent=11 // pred_check
          %p193 = pneg %p63
        $region14: #{tpu_custom_call.1} parent=11 // pred_check_branch
          %195 = sbr.rel (%p193) target = $region16
        $region15: #{tpu_custom_call.1} parent=11 // pred_region
          _
        $region16: #{tpu_custom_call.1} parent=11 // pred_fallthru
          _
        // Predicated region
        $region17: #{tpu_custom_call.1} parent=11 // pred_check
          %p196 = pneg %p84
        $region18: #{tpu_custom_call.1} parent=11 // pred_check_branch
          %198 = sbr.rel (%p196) target = $region20
        $region19: #{tpu_custom_call.1} parent=11 // pred_region
          _
        $region20: #{tpu_custom_call.1} parent=11 // pred_fallthru
          _
        // Predicated region
        $region21: #{tpu_custom_call.1} parent=11 // pred_check
          %p199 = pneg %p105
        $region22: #{tpu_custom_call.1} parent=11 // pred_check_branch
          %201 = sbr.rel (%p199) target = $region24
        $region23: #{tpu_custom_call.1} parent=11 // pred_region
          _
        $region24: #{tpu_custom_call.1} parent=11 // pred_fallthru
          _
        // Predicated region
        $region25: #{tpu_custom_call.1} parent=11 // pred_check
          %p202 = pneg %p126
        $region26: #{tpu_custom_call.1} parent=11 // pred_check_branch
          %204 = sbr.rel (%p202) target = $region28
        $region27: #{tpu_custom_call.1} parent=11 // pred_region
          _
        $region28: #{tpu_custom_call.1} parent=11 // pred_fallthru
          _
      $region12: #{tpu_custom_call.1} parent=5 // pred_fallthru
        _
      %p205 = scmp.lt.s32.totalorder %s16, 2
      // Predicated region
      $region29: #{tpu_custom_call.1} parent=5 // pred_check
        %p206 = pneg %p205
      $region30: #{tpu_custom_call.1} parent=5 // pred_check_branch
        %208 = sbr.rel (%p206) target = $region32
      $region31: #{tpu_custom_call.1} parent=5 // pred_region
        // Predicated region
        $region33: #{tpu_custom_call.1} parent=31 // pred_check
          %p209 = pneg %p36
        $region34: #{tpu_custom_call.1} parent=31 // pred_check_branch
          %211 = sbr.rel (%p209) target = $region36
        $region35: #{tpu_custom_call.1} parent=31 // pred_region
          %s212 = smul.u32 16, %s16
          %p213 = scmp.lt.s32.totalorder %s212, 31
          %s214 = scalar_select %p213, %s212, 31
          %s215 = smul.addr %s214, 4
          %s216 = scalar_lea.vmem %s0, %s215
          %s217 = smul.u32 16, %s16
        $region36: #{tpu_custom_call.1} parent=31 // pred_fallthru
          _
      $region32: #{tpu_custom_call.1} parent=5 // pred_fallthru
        _
      %p218 = scmp.le.s32.totalorder 1, %s16
      %p219 = scmp.lt.s32.totalorder %s16, 3
      %p220 = pnand %p218, %p219
      %p221 = pneg %p220
      // Predicated region
      $region37: #{tpu_custom_call.1} parent=5 // pred_check
        _
      $region38: #{tpu_custom_call.1} parent=5 // pred_check_branch
        %223 = sbr.rel (%p220) target = $region40
      $region39: #{tpu_custom_call.1} parent=5 // pred_region
        %s224 = ssub.s32 %s16, 1
        %s225 = smul.u32 16, %s21
        %p226 = scmp.lt.s32.totalorder %s225, 31
        %s227 = scalar_select %p226, %s225, 31
        %s228 = smul.addr %s227, 4
        %s229 = scalar_lea.vmem %s0, %s228
        %p230 = pneg %p42
        %p231 = pneg %p39
        %p232 = pneg %p63
        %p233 = pneg %p60
        %p234 = pneg %p84
        %p235 = pneg %p81
        %p236 = pneg %p105
        %p237 = pneg %p102
        %p238 = pneg %p126
        %p239 = pneg %p123
        %p240 = pneg %p152
        %p241 = pneg %p149
        %s242 = sand.u32 %s139, 1
        %s243 = scalar_lea.sflag [#allocation3], %s242
        %s244 = sand.u32 %s139, 1
        %s245 = smul.addr %s244, 128
        %s246 = scalar_lea.vmem [#allocation2], %s245
        %p247 = pneg %p178
        %p248 = pneg %p175
        %s249 = smul.u32 16, %s21
        %p250 = scmp.lt.s32.totalorder %s249, 31
        %s251 = scalar_select %p250, %s249, 31
        %s252 = smul.addr %s251, 8
        %s253 = scalar_lea.vmem %s6, %s252
        %s254 = smul.u32 16, %s21
        %p255 = scmp.lt.s32.totalorder %s254, 31
        %s256 = scalar_select %p255, %s254, 31
        %s257 = smul.addr %s256, 4
        %s258 = scalar_lea.vmem %s0, %s257
        %s259 = smul.u32 16, %s21
        %s260 = smul.u32 16, %s21
        %s261 = smul.u32 16, %s21
        %p262 = scmp.lt.s32.totalorder %s261, 31
        %s263 = scalar_select %p262, %s261, 31
        %s264 = smul.addr %s263, 8
        %s265 = scalar_lea.vmem %s6, %s264
        %s266 = smul.u32 16, %s21
        %v268 = vld [vmem:[%s258] sm:$0xf]
        %v269 = vld [vmem:[%s258 + $0x4] sm:$0xf]
        %v270 = vld [vmem:[%s258 + $0x8] sm:$0xf]
        %v271 = vld [vmem:[%s258 + $0xc] sm:$0xf]
        %v272 = vld [vmem:[%s258 + $0x10] sm:$0xf]
        %v273 = vld [vmem:[%s258 + $0x14] sm:$0xf]
        %v274 = vld [vmem:[%s258 + $0x18] sm:$0xf]
        %v275 = vld [vmem:[%s258 + $0x1c] sm:$0xf]
        %v276 = vld [vmem:[%s258 + $0x20] sm:$0xf]
        %v277 = vld [vmem:[%s258 + $0x24] sm:$0xf]
        %v278 = vld [vmem:[%s258 + $0x28] sm:$0xf]
        %v279 = vld [vmem:[%s258 + $0x2c] sm:$0xf]
        %v280 = vld [vmem:[%s258 + $0x30] sm:$0xf]
        %v281 = vld [vmem:[%s258 + $0x34] sm:$0xf]
        %v282 = vld [vmem:[%s258 + $0x38] sm:$0xf]
        %v283 = vld [vmem:[%s258 + $0x3c] sm:$0xf]
        %v284 = vld [vmem:[%s1] sm:$0xf]
        %v285 = vld [vmem:[%s1 + $0x4] sm:$0xf]
        %v286 = vld [vmem:[%s1 + $0x8] sm:$0xf]
        %v287 = vld [vmem:[%s1 + $0xc] sm:$0xf]
        %v288 = vld [vmem:[%s2] sm:$0x1]
        %v290 = vlaneseq
        %v291 = vshrl.u32 %v290, 7
        %v292 = vsub.s32 0, %v291
        %v293 = vrot.slane %v288, %v292
        %v311 = vunpack.c.l.b16 %v268
        %v312 = vunpack.c.l.b16 %v269
        %v313 = vunpack.c.l.b16 %v270
        %v314 = vunpack.c.l.b16 %v271
        %v315 = vunpack.c.l.b16 %v272
        %v316 = vunpack.c.l.b16 %v273
        %v317 = vunpack.c.l.b16 %v274
        %v318 = vunpack.c.l.b16 %v275
        %v319 = vunpack.c.l.b16 %v276
        %v320 = vunpack.c.l.b16 %v277
        %v321 = vunpack.c.l.b16 %v278
        %v322 = vunpack.c.l.b16 %v279
        %v323 = vunpack.c.l.b16 %v280
        %v324 = vunpack.c.l.b16 %v281
        %v325 = vunpack.c.l.b16 %v282
        %v326 = vunpack.c.l.b16 %v283
        %v327 = vpack.c.b16 %v312, %v311
        %v328 = vpack.c.b16 %v314, %v313
        %v329 = vpack.c.b16 %v316, %v315
        %v330 = vpack.c.b16 %v318, %v317
        %v331 = vpack.c.b16 %v320, %v319
        %v332 = vpack.c.b16 %v322, %v321
        %v333 = vpack.c.b16 %v324, %v323
        %v334 = vpack.c.b16 %v326, %v325
        %v339 = vunpack.c.l.b16 %v284
        %v340 = vunpack.c.l.b16 %v285
        %v341 = vunpack.c.l.b16 %v286
        %v342 = vunpack.c.l.b16 %v287
        %v343 = vpack.c.b16 %v340, %v339
        %v344 = vpack.c.b16 %v342, %v341
        %vm347 = vcmask 261120
        %v349 = vsel %vm347, %v327, 0
        %v352 = vsel %vm347, %v328, 0
        %v355 = vsel %vm347, %v329, 0
        %v358 = vsel %vm347, %v330, 0
        %v361 = vsel %vm347, %v331, 0
        %v364 = vsel %vm347, %v332, 0
        %v367 = vsel %vm347, %v333, 0
        %v370 = vsel %vm347, %v334, 0
        %372 = vmatprep.subr.bf16.mxu0 0
        %373 = vmatpush1.bf16.msra.mxu0 %v343
        %374 = vmatprep.subr.bf16.mxu0 0
        %375 = vmatpush1.bf16.msra.mxu0 %v344
        %376 = vmatprep.subr.bf16.mxu0 0
        %377 = vmatpush1.bf16.msra.mxu0 0
        %378 = vmatprep.subr.bf16.mxu0 0
        %379 = vmatpush1.bf16.msra.mxu0 0
        %380 = vmatprep.subr.bf16.mxu0 0
        %381 = vmatpush1.bf16.msra.mxu0 0
        %382 = vmatprep.subr.bf16.mxu0 0
        %383 = vmatpush1.bf16.msra.mxu0 0
        %384 = vmatprep.subr.bf16.mxu0 0
        %385 = vmatpush1.bf16.msra.mxu0 0
        %386 = vmatprep.subr.bf16.mxu0 0
        %387 = vmatpush1.bf16.msra.mxu0 0
        %388 = vmatprep.subr.bf16.mxu0 0
        %389 = vmatpush1.bf16.msra.mxu0 0
        %390 = vmatprep.subr.bf16.mxu0 0
        %391 = vmatpush1.bf16.msra.mxu0 0
        %392 = vmatprep.subr.bf16.mxu0 0
        %393 = vmatpush1.bf16.msra.mxu0 0
        %394 = vmatprep.subr.bf16.mxu0 0
        %395 = vmatpush1.bf16.msra.mxu0 0
        %396 = vmatprep.subr.bf16.mxu0 0
        %397 = vmatpush1.bf16.msra.mxu0 0
        %398 = vmatprep.subr.bf16.mxu0 0
        %399 = vmatpush1.bf16.msra.mxu0 0
        %400 = vmatprep.subr.bf16.mxu0 0
        %401 = vmatpush1.bf16.msra.mxu0 0
        %402 = vmatprep.subr.bf16.mxu0 0
        %403 = vmatpush1.bf16.msra.mxu0 0
        %404 = vmatprep.mubr.bf16.mxu0 0
        %405 = vmatmul.mubr.bf16.gmra.mrb[0].mxu0 %v349
        %v406 = vpop.f32.mrb[0].mxu0
        %v407 = vadd.f32 %v293, %v406
        %v408 = vpop.f32.mrb[0].mxu0
        %v409 = vpop.f32.mrb[0].mxu0
        %v410 = vadd.f32 %v293, %v409
        %v411 = vpop.f32.mrb[0].mxu0
        %412 = vmatprep.mubr.bf16.mxu0 0
        %413 = vmatmul.mubr.bf16.gmra.mrb[0].mxu0 %v352
        %v414 = vpop.f32.mrb[0].mxu0
        %v415 = vadd.f32 %v293, %v414
        %v416 = vpop.f32.mrb[0].mxu0
        %v417 = vpop.f32.mrb[0].mxu0
        %v418 = vadd.f32 %v293, %v417
        %v419 = vpop.f32.mrb[0].mxu0
        %420 = vmatprep.mubr.bf16.mxu0 0
        %421 = vmatmul.mubr.bf16.gmra.mrb[0].mxu0 %v355
        %v422 = vpop.f32.mrb[0].mxu0
        %v423 = vadd.f32 %v293, %v422
        %v424 = vpop.f32.mrb[0].mxu0
        %v425 = vpop.f32.mrb[0].mxu0
        %v426 = vadd.f32 %v293, %v425
        %v427 = vpop.f32.mrb[0].mxu0
        %428 = vmatprep.mubr.bf16.mxu0 0
        %429 = vmatmul.mubr.bf16.gmra.mrb[0].mxu0 %v358
        %v430 = vpop.f32.mrb[0].mxu0
        %v431 = vadd.f32 %v293, %v430
        %v432 = vpop.f32.mrb[0].mxu0
        %v433 = vpop.f32.mrb[0].mxu0
        %v434 = vadd.f32 %v293, %v433
        %v435 = vpop.f32.mrb[0].mxu0
        %436 = vmatprep.mubr.bf16.mxu0 0
        %437 = vmatmul.mubr.bf16.gmra.mrb[0].mxu0 %v361
        %v438 = vpop.f32.mrb[0].mxu0
        %v439 = vadd.f32 %v293, %v438
        %v440 = vpop.f32.mrb[0].mxu0
        %v441 = vpop.f32.mrb[0].mxu0
        %v442 = vadd.f32 %v293, %v441
        %v443 = vpop.f32.mrb[0].mxu0
        %444 = vmatprep.mubr.bf16.mxu0 0
        %445 = vmatmul.mubr.bf16.gmra.mrb[0].mxu0 %v364
        %v446 = vpop.f32.mrb[0].mxu0
        %v447 = vadd.f32 %v293, %v446
        %v448 = vpop.f32.mrb[0].mxu0
        %v449 = vpop.f32.mrb[0].mxu0
        %v450 = vadd.f32 %v293, %v449
        %v451 = vpop.f32.mrb[0].mxu0
        %452 = vmatprep.mubr.bf16.mxu0 0
        %453 = vmatmul.mubr.bf16.gmra.mrb[0].mxu0 %v367
        %v454 = vpop.f32.mrb[0].mxu0
        %v455 = vadd.f32 %v293, %v454
        %v456 = vpop.f32.mrb[0].mxu0
        %v457 = vpop.f32.mrb[0].mxu0
        %v458 = vadd.f32 %v293, %v457
        %v459 = vpop.f32.mrb[0].mxu0
        %460 = vmatprep.mubr.bf16.mxu0 0
        %461 = vmatmul.mubr.bf16.gmra.mrb[0].mxu0 %v370
        %v462 = vpop.f32.mrb[0].mxu0
        %v463 = vadd.f32 %v293, %v462
        %v464 = vpop.f32.mrb[0].mxu0
        %v465 = vpop.f32.mrb[0].mxu0
        %v466 = vadd.f32 %v293, %v465
        %v467 = vpop.f32.mrb[0].mxu0
        %468 = vdwg.mxu0
        %vm469 = vcmp.gt.f32.partialorder %v407, 0.0
        %vm470 = vcmp.gt.f32.partialorder %v410, 0.0
        %vm471 = vcmp.gt.f32.partialorder %v415, 0.0
        %vm472 = vcmp.gt.f32.partialorder %v418, 0.0
        %vm473 = vcmp.gt.f32.partialorder %v423, 0.0
        %vm474 = vcmp.gt.f32.partialorder %v426, 0.0
        %vm475 = vcmp.gt.f32.partialorder %v431, 0.0
        %vm476 = vcmp.gt.f32.partialorder %v434, 0.0
        %vm477 = vcmp.gt.f32.partialorder %v439, 0.0
        %vm478 = vcmp.gt.f32.partialorder %v442, 0.0
        %vm479 = vcmp.gt.f32.partialorder %v447, 0.0
        %vm480 = vcmp.gt.f32.partialorder %v450, 0.0
        %vm481 = vcmp.gt.f32.partialorder %v455, 0.0
        %vm482 = vcmp.gt.f32.partialorder %v458, 0.0
        %vm483 = vcmp.gt.f32.partialorder %v463, 0.0
        %vm484 = vcmp.gt.f32.partialorder %v466, 0.0
        %v485 = vmin.f32 %v407, 0.0
        %v486 = vmin.f32 %v410, 0.0
        %v487 = vmin.f32 %v415, 0.0
        %v488 = vmin.f32 %v418, 0.0
        %v489 = vmin.f32 %v423, 0.0
        %v490 = vmin.f32 %v426, 0.0
        %v491 = vmin.f32 %v431, 0.0
        %v492 = vmin.f32 %v434, 0.0
        %v493 = vmin.f32 %v439, 0.0
        %v494 = vmin.f32 %v442, 0.0
        %v495 = vmin.f32 %v447, 0.0
        %v496 = vmin.f32 %v450, 0.0
        %v497 = vmin.f32 %v455, 0.0
        %v498 = vmin.f32 %v458, 0.0
        %v499 = vmin.f32 %v463, 0.0
        %v500 = vmin.f32 %v466, 0.0
        %v501 = vmul.f32 %v485, 1.442695
        %v502 = vpow.pop %v501
        %v503 = vmul.f32 %v486, 1.442695
        %v504 = vpow.pop %v503
        %v505 = vmul.f32 %v487, 1.442695
        %v506 = vpow.pop %v505
        %v507 = vmul.f32 %v488, 1.442695
        %v508 = vpow.pop %v507
        %v509 = vmul.f32 %v489, 1.442695
        %v510 = vpow.pop %v509
        %v511 = vmul.f32 %v490, 1.442695
        %v512 = vpow.pop %v511
        %v513 = vmul.f32 %v491, 1.442695
        %v514 = vpow.pop %v513
        %v515 = vmul.f32 %v492, 1.442695
        %v516 = vpow.pop %v515
        %v517 = vmul.f32 %v493, 1.442695
        %v518 = vpow.pop %v517
        %v519 = vmul.f32 %v494, 1.442695
        %v520 = vpow.pop %v519
        %v521 = vmul.f32 %v495, 1.442695
        %v522 = vpow.pop %v521
        %v523 = vmul.f32 %v496, 1.442695
        %v524 = vpow.pop %v523
        %v525 = vmul.f32 %v497, 1.442695
        %v526 = vpow.pop %v525
        %v527 = vmul.f32 %v498, 1.442695
        %v528 = vpow.pop %v527
        %v529 = vmul.f32 %v499, 1.442695
        %v530 = vpow.pop %v529
        %v531 = vmul.f32 %v500, 1.442695
        %v532 = vpow.pop %v531
        %v533 = vsub.f32 %v502, 1.0
        %v534 = vsub.f32 %v504, 1.0
        %v535 = vsub.f32 %v506, 1.0
        %v536 = vsub.f32 %v508, 1.0
        %v537 = vsub.f32 %v510, 1.0
        %v538 = vsub.f32 %v512, 1.0
        %v539 = vsub.f32 %v514, 1.0
        %v540 = vsub.f32 %v516, 1.0
        %v541 = vsub.f32 %v518, 1.0
        %v542 = vsub.f32 %v520, 1.0
        %v543 = vsub.f32 %v522, 1.0
        %v544 = vsub.f32 %v524, 1.0
        %v545 = vsub.f32 %v526, 1.0
        %v546 = vsub.f32 %v528, 1.0
        %v547 = vsub.f32 %v530, 1.0
        %v548 = vsub.f32 %v532, 1.0
        %v549 = vsel %vm469, %v407, %v533
        %v550 = vsel %vm470, %v410, %v534
        %v551 = vsel %vm471, %v415, %v535
        %v552 = vsel %vm472, %v418, %v536
        %v553 = vsel %vm473, %v423, %v537
        %v554 = vsel %vm474, %v426, %v538
        %v555 = vsel %vm475, %v431, %v539
        %v556 = vsel %vm476, %v434, %v540
        %v557 = vsel %vm477, %v439, %v541
        %v558 = vsel %vm478, %v442, %v542
        %v559 = vsel %vm479, %v447, %v543
        %v560 = vsel %vm480, %v450, %v544
        %v561 = vsel %vm481, %v455, %v545
        %v562 = vsel %vm482, %v458, %v546
        %v563 = vsel %vm483, %v463, %v547
        %v564 = vsel %vm484, %v466, %v548
        %v565 = vpack.c.bf16 %v550, %v549
        %v566 = vpack.c.bf16 %v552, %v551
        %v567 = vpack.c.bf16 %v554, %v553
        %v568 = vpack.c.bf16 %v556, %v555
        %v569 = vpack.c.bf16 %v558, %v557
        %v570 = vpack.c.bf16 %v560, %v559
        %v571 = vpack.c.bf16 %v562, %v561
        %v572 = vpack.c.bf16 %v564, %v563
        %v573 = vld [vmem:[%s3] sm:$0xf]
        %v574 = vld [vmem:[%s3 + $0x4] sm:$0xf]
        %v575 = vld [vmem:[%s3 + $0x8] sm:$0xf]
        %v576 = vld [vmem:[%s3 + $0xc] sm:$0xf]
        %v577 = vld [vmem:[%s4] sm:$0x1]
        %v579 = vlaneseq
        %v580 = vshrl.u32 %v579, 7
        %v581 = vsub.s32 0, %v580
        %v582 = vrot.slane %v577, %v581
        %v588 = vunpack.c.l.b16 %v573
        %v589 = vunpack.c.l.b16 %v574
        %v590 = vunpack.c.l.b16 %v575
        %v591 = vunpack.c.l.b16 %v576
        %v592 = vpack.c.b16 %v589, %v588
        %v593 = vpack.c.b16 %v591, %v590
        %v597 = vsel %vm347, %v565, 0
        %v600 = vsel %vm347, %v566, 0
        %v603 = vsel %vm347, %v567, 0
        %v606 = vsel %vm347, %v568, 0
        %v609 = vsel %vm347, %v569, 0
        %v612 = vsel %vm347, %v570, 0
        %v615 = vsel %vm347, %v571, 0
        %v618 = vsel %vm347, %v572, 0
        %620 = vmatprep.subr.bf16.mxu0 0
        %621 = vmatpush1.bf16.msra.mxu0 %v592
        %622 = vmatprep.subr.bf16.mxu0 0
        %623 = vmatpush1.bf16.msra.mxu0 %v593
        %624 = vmatprep.subr.bf16.mxu0 0
        %625 = vmatpush1.bf16.msra.mxu0 0
        %626 = vmatprep.subr.bf16.mxu0 0
        %627 = vmatpush1.bf16.msra.mxu0 0
        %628 = vmatprep.subr.bf16.mxu0 0
        %629 = vmatpush1.bf16.msra.mxu0 0
        %630 = vmatprep.subr.bf16.mxu0 0
        %631 = vmatpush1.bf16.msra.mxu0 0
        %632 = vmatprep.subr.bf16.mxu0 0
        %633 = vmatpush1.bf16.msra.mxu0 0
        %634 = vmatprep.subr.bf16.mxu0 0
        %635 = vmatpush1.bf16.msra.mxu0 0
        %636 = vmatprep.subr.bf16.mxu0 0
        %637 = vmatpush1.bf16.msra.mxu0 0
        %638 = vmatprep.subr.bf16.mxu0 0
        %639 = vmatpush1.bf16.msra.mxu0 0
        %640 = vmatprep.subr.bf16.mxu0 0
        %641 = vmatpush1.bf16.msra.mxu0 0
        %642 = vmatprep.subr.bf16.mxu0 0
        %643 = vmatpush1.bf16.msra.mxu0 0
        %644 = vmatprep.subr.bf16.mxu0 0
        %645 = vmatpush1.bf16.msra.mxu0 0
        %646 = vmatprep.subr.bf16.mxu0 0
        %647 = vmatpush1.bf16.msra.mxu0 0
        %648 = vmatprep.subr.bf16.mxu0 0
        %649 = vmatpush1.bf16.msra.mxu0 0
        %650 = vmatprep.subr.bf16.mxu0 0
        %651 = vmatpush1.bf16.msra.mxu0 0
        %652 = vmatprep.mubr.bf16.mxu0 0
        %653 = vmatmul.mubr.bf16.gmra.mrb[0].mxu0 %v597
        %v654 = vpop.f32.mrb[0].mxu0
        %v655 = vadd.f32 %v582, %v654
        %v656 = vpop.f32.mrb[0].mxu0
        %v657 = vpop.f32.mrb[0].mxu0
        %v658 = vadd.f32 %v582, %v657
        %v659 = vpop.f32.mrb[0].mxu0
        %660 = vmatprep.mubr.bf16.mxu0 0
        %661 = vmatmul.mubr.bf16.gmra.mrb[0].mxu0 %v600
        %v662 = vpop.f32.mrb[0].mxu0
        %v663 = vadd.f32 %v582, %v662
        %v664 = vpop.f32.mrb[0].mxu0
        %v665 = vpop.f32.mrb[0].mxu0
        %v666 = vadd.f32 %v582, %v665
        %v667 = vpop.f32.mrb[0].mxu0
        %668 = vmatprep.mubr.bf16.mxu0 0
        %669 = vmatmul.mubr.bf16.gmra.mrb[0].mxu0 %v603
        %v670 = vpop.f32.mrb[0].mxu0
        %v671 = vadd.f32 %v582, %v670
        %v672 = vpop.f32.mrb[0].mxu0
        %v673 = vpop.f32.mrb[0].mxu0
        %v674 = vadd.f32 %v582, %v673
        %v675 = vpop.f32.mrb[0].mxu0
        %676 = vmatprep.mubr.bf16.mxu0 0
        %677 = vmatmul.mubr.bf16.gmra.mrb[0].mxu0 %v606
        %v678 = vpop.f32.mrb[0].mxu0
        %v679 = vadd.f32 %v582, %v678
        %v680 = vpop.f32.mrb[0].mxu0
        %v681 = vpop.f32.mrb[0].mxu0
        %v682 = vadd.f32 %v582, %v681
        %v683 = vpop.f32.mrb[0].mxu0
        %684 = vmatprep.mubr.bf16.mxu0 0
        %685 = vmatmul.mubr.bf16.gmra.mrb[0].mxu0 %v609
        %v686 = vpop.f32.mrb[0].mxu0
        %v687 = vadd.f32 %v582, %v686
        %v688 = vpop.f32.mrb[0].mxu0
        %v689 = vpop.f32.mrb[0].mxu0
        %v690 = vadd.f32 %v582, %v689
        %v691 = vpop.f32.mrb[0].mxu0
        %692 = vmatprep.mubr.bf16.mxu0 0
        %693 = vmatmul.mubr.bf16.gmra.mrb[0].mxu0 %v612
        %v694 = vpop.f32.mrb[0].mxu0
        %v695 = vadd.f32 %v582, %v694
        %v696 = vpop.f32.mrb[0].mxu0
        %v697 = vpop.f32.mrb[0].mxu0
        %v698 = vadd.f32 %v582, %v697
        %v699 = vpop.f32.mrb[0].mxu0
        %700 = vmatprep.mubr.bf16.mxu0 0
        %701 = vmatmul.mubr.bf16.gmra.mrb[0].mxu0 %v615
        %v702 = vpop.f32.mrb[0].mxu0
        %v703 = vadd.f32 %v582, %v702
        %v704 = vpop.f32.mrb[0].mxu0
        %v705 = vpop.f32.mrb[0].mxu0
        %v706 = vadd.f32 %v582, %v705
        %v707 = vpop.f32.mrb[0].mxu0
        %708 = vmatprep.mubr.bf16.mxu0 0
        %709 = vmatmul.mubr.bf16.gmra.mrb[0].mxu0 %v618
        %v710 = vpop.f32.mrb[0].mxu0
        %v711 = vadd.f32 %v582, %v710
        %v712 = vpop.f32.mrb[0].mxu0
        %v713 = vpop.f32.mrb[0].mxu0
        %v714 = vadd.f32 %v582, %v713
        %v715 = vpop.f32.mrb[0].mxu0
        %716 = vdwg.mxu0
        %717 = vst [vmem:[%s246] sm:$0xff] %v655
        %718 = vst [vmem:[%s246 + $0x8] sm:$0xff] %v658
        %719 = vst [vmem:[%s246 + $0x10] sm:$0xff] %v663
        %720 = vst [vmem:[%s246 + $0x18] sm:$0xff] %v666
        %721 = vst [vmem:[%s246 + $0x20] sm:$0xff] %v671
        %722 = vst [vmem:[%s246 + $0x28] sm:$0xff] %v674
        %723 = vst [vmem:[%s246 + $0x30] sm:$0xff] %v679
        %724 = vst [vmem:[%s246 + $0x38] sm:$0xff] %v682
        %725 = vst [vmem:[%s246 + $0x40] sm:$0xff] %v687
        %726 = vst [vmem:[%s246 + $0x48] sm:$0xff] %v690
        %727 = vst [vmem:[%s246 + $0x50] sm:$0xff] %v695
        %728 = vst [vmem:[%s246 + $0x58] sm:$0xff] %v698
        %729 = vst [vmem:[%s246 + $0x60] sm:$0xff] %v703
        %730 = vst [vmem:[%s246 + $0x68] sm:$0xff] %v706
        %731 = vst [vmem:[%s246 + $0x70] sm:$0xff] %v711
        %732 = vst [vmem:[%s246 + $0x78] sm:$0xff] %v714
        %733 = vmax.xlane.f32.xlu0 %v655
        %v734 = vpop.xlane.xlu0 %733
        %735 = vmax.xlane.f32.xlu0 %v658
        %v736 = vpop.xlane.xlu0 %735
        %737 = vmax.xlane.f32.xlu0 %v663
        %v738 = vpop.xlane.xlu0 %737
        %739 = vmax.xlane.f32.xlu0 %v666
        %v740 = vpop.xlane.xlu0 %739
        %741 = vmax.xlane.f32.xlu0 %v671
        %v742 = vpop.xlane.xlu0 %741
        %743 = vmax.xlane.f32.xlu0 %v674
        %v744 = vpop.xlane.xlu0 %743
        %745 = vmax.xlane.f32.xlu0 %v679
        %v746 = vpop.xlane.xlu0 %745
        %747 = vmax.xlane.f32.xlu0 %v682
        %v748 = vpop.xlane.xlu0 %747
        %749 = vmax.xlane.f32.xlu0 %v687
        %v750 = vpop.xlane.xlu0 %749
        %751 = vmax.xlane.f32.xlu0 %v690
        %v752 = vpop.xlane.xlu0 %751
        %753 = vmax.xlane.f32.xlu0 %v695
        %v754 = vpop.xlane.xlu0 %753
        %755 = vmax.xlane.f32.xlu0 %v698
        %v756 = vpop.xlane.xlu0 %755
        %757 = vmax.xlane.f32.xlu0 %v703
        %v758 = vpop.xlane.xlu0 %757
        %759 = vmax.xlane.f32.xlu0 %v706
        %v760 = vpop.xlane.xlu0 %759
        %761 = vmax.xlane.f32.xlu0 %v711
        %v762 = vpop.xlane.xlu0 %761
        %763 = vmax.xlane.f32.xlu0 %v714
        %v764 = vpop.xlane.xlu0 %763
        %v765 = vsub.f32 %v655, %v734
        %v766 = vsub.f32 %v658, %v736
        %v767 = vsub.f32 %v663, %v738
        %v768 = vsub.f32 %v666, %v740
        %v769 = vsub.f32 %v671, %v742
        %v770 = vsub.f32 %v674, %v744
        %v771 = vsub.f32 %v679, %v746
        %v772 = vsub.f32 %v682, %v748
        %v773 = vsub.f32 %v687, %v750
        %v774 = vsub.f32 %v690, %v752
        %v775 = vsub.f32 %v695, %v754
        %v776 = vsub.f32 %v698, %v756
        %v777 = vsub.f32 %v703, %v758
        %v778 = vsub.f32 %v706, %v760
        %v779 = vsub.f32 %v711, %v762
        %v780 = vsub.f32 %v714, %v764
        %v781 = vmul.f32 %v765, 1.442695
        %v782 = vpow.pop %v781
        %v783 = vmul.f32 %v766, 1.442695
        %v784 = vpow.pop %v783
        %v785 = vmul.f32 %v767, 1.442695
        %v786 = vpow.pop %v785
        %v787 = vmul.f32 %v768, 1.442695
        %v788 = vpow.pop %v787
        %v789 = vmul.f32 %v769, 1.442695
        %v790 = vpow.pop %v789
        %v791 = vmul.f32 %v770, 1.442695
        %v792 = vpow.pop %v791
        %v793 = vmul.f32 %v771, 1.442695
        %v794 = vpow.pop %v793
        %v795 = vmul.f32 %v772, 1.442695
        %v796 = vpow.pop %v795
        %v797 = vmul.f32 %v773, 1.442695
        %v798 = vpow.pop %v797
        %v799 = vmul.f32 %v774, 1.442695
        %v800 = vpow.pop %v799
        %v801 = vmul.f32 %v775, 1.442695
        %v802 = vpow.pop %v801
        %v803 = vmul.f32 %v776, 1.442695
        %v804 = vpow.pop %v803
        %v805 = vmul.f32 %v777, 1.442695
        %v806 = vpow.pop %v805
        %v807 = vmul.f32 %v778, 1.442695
        %v808 = vpow.pop %v807
        %v809 = vmul.f32 %v779, 1.442695
        %v810 = vpow.pop %v809
        %v811 = vmul.f32 %v780, 1.442695
        %v812 = vpow.pop %v811
        %813 = vadd.xlane.f32.xlu0 %v782
        %v814 = vpop.xlane.xlu0 %813
        %815 = vadd.xlane.f32.xlu0 %v784
        %v816 = vpop.xlane.xlu0 %815
        %817 = vadd.xlane.f32.xlu0 %v786
        %v818 = vpop.xlane.xlu0 %817
        %819 = vadd.xlane.f32.xlu0 %v788
        %v820 = vpop.xlane.xlu0 %819
        %821 = vadd.xlane.f32.xlu0 %v790
        %v822 = vpop.xlane.xlu0 %821
        %823 = vadd.xlane.f32.xlu0 %v792
        %v824 = vpop.xlane.xlu0 %823
        %825 = vadd.xlane.f32.xlu0 %v794
        %v826 = vpop.xlane.xlu0 %825
        %827 = vadd.xlane.f32.xlu0 %v796
        %v828 = vpop.xlane.xlu0 %827
        %829 = vadd.xlane.f32.xlu0 %v798
        %v830 = vpop.xlane.xlu0 %829
        %831 = vadd.xlane.f32.xlu0 %v800
        %v832 = vpop.xlane.xlu0 %831
        %833 = vadd.xlane.f32.xlu0 %v802
        %v834 = vpop.xlane.xlu0 %833
        %835 = vadd.xlane.f32.xlu0 %v804
        %v836 = vpop.xlane.xlu0 %835
        %837 = vadd.xlane.f32.xlu0 %v806
        %v838 = vpop.xlane.xlu0 %837
        %839 = vadd.xlane.f32.xlu0 %v808
        %v840 = vpop.xlane.xlu0 %839
        %841 = vadd.xlane.f32.xlu0 %v810
        %v842 = vpop.xlane.xlu0 %841
        %843 = vadd.xlane.f32.xlu0 %v812
        %v844 = vpop.xlane.xlu0 %843
        %v845 = vlog2.pop %v814
        %v846 = vmul.f32 %v845, 0.6931472
        %v847 = vlog2.pop %v816
        %v848 = vmul.f32 %v847, 0.6931472
        %v849 = vlog2.pop %v818
        %v850 = vmul.f32 %v849, 0.6931472
        %v851 = vlog2.pop %v820
        %v852 = vmul.f32 %v851, 0.6931472
        %v853 = vlog2.pop %v822
        %v854 = vmul.f32 %v853, 0.6931472
        %v855 = vlog2.pop %v824
        %v856 = vmul.f32 %v855, 0.6931472
        %v857 = vlog2.pop %v826
        %v858 = vmul.f32 %v857, 0.6931472
        %v859 = vlog2.pop %v828
        %v860 = vmul.f32 %v859, 0.6931472
        %v861 = vlog2.pop %v830
        %v862 = vmul.f32 %v861, 0.6931472
        %v863 = vlog2.pop %v832
        %v864 = vmul.f32 %v863, 0.6931472
        %v865 = vlog2.pop %v834
        %v866 = vmul.f32 %v865, 0.6931472
        %v867 = vlog2.pop %v836
        %v868 = vmul.f32 %v867, 0.6931472
        %v869 = vlog2.pop %v838
        %v870 = vmul.f32 %v869, 0.6931472
        %v871 = vlog2.pop %v840
        %v872 = vmul.f32 %v871, 0.6931472
        %v873 = vlog2.pop %v842
        %v874 = vmul.f32 %v873, 0.6931472
        %v875 = vlog2.pop %v844
        %v876 = vmul.f32 %v875, 0.6931472
        %v877 = vadd.f32 %v734, %v846
        %v878 = vadd.f32 %v736, %v848
        %v879 = vadd.f32 %v738, %v850
        %v880 = vadd.f32 %v740, %v852
        %v881 = vadd.f32 %v742, %v854
        %v882 = vadd.f32 %v744, %v856
        %v883 = vadd.f32 %v746, %v858
        %v884 = vadd.f32 %v748, %v860
        %v885 = vadd.f32 %v750, %v862
        %v886 = vadd.f32 %v752, %v864
        %v887 = vadd.f32 %v754, %v866
        %v888 = vadd.f32 %v756, %v868
        %v889 = vadd.f32 %v758, %v870
        %v890 = vadd.f32 %v760, %v872
        %v891 = vadd.f32 %v762, %v874
        %v892 = vadd.f32 %v764, %v876
        %vm893 = vcmask 7168
        %894 = vst.msk [vmem:[%s265] sm:$0xff] %vm893, %v877
        %895 = vst.msk [vmem:[%s265 + $0x8] sm:$0xff] %vm893, %v878
        %896 = vst.msk [vmem:[%s265 + $0x10] sm:$0xff] %vm893, %v879
        %897 = vst.msk [vmem:[%s265 + $0x18] sm:$0xff] %vm893, %v880
        %898 = vst.msk [vmem:[%s265 + $0x20] sm:$0xff] %vm893, %v881
        %899 = vst.msk [vmem:[%s265 + $0x28] sm:$0xff] %vm893, %v882
        %900 = vst.msk [vmem:[%s265 + $0x30] sm:$0xff] %vm893, %v883
        %901 = vst.msk [vmem:[%s265 + $0x38] sm:$0xff] %vm893, %v884
        %902 = vst.msk [vmem:[%s265 + $0x40] sm:$0xff] %vm893, %v885
        %903 = vst.msk [vmem:[%s265 + $0x48] sm:$0xff] %vm893, %v886
        %904 = vst.msk [vmem:[%s265 + $0x50] sm:$0xff] %vm893, %v887
        %905 = vst.msk [vmem:[%s265 + $0x58] sm:$0xff] %vm893, %v888
        %906 = vst.msk [vmem:[%s265 + $0x60] sm:$0xff] %vm893, %v889
        %907 = vst.msk [vmem:[%s265 + $0x68] sm:$0xff] %vm893, %v890
        %908 = vst.msk [vmem:[%s265 + $0x70] sm:$0xff] %vm893, %v891
        %909 = vst.msk [vmem:[%s265 + $0x78] sm:$0xff] %vm893, %v892
        %s910 = sand.u32 %s139, 1
        %s911 = scalar_lea.sflag [#allocation3], %s910
        %s912 = sand.u32 %s139, 1
        %s913 = smul.addr %s912, 128
        %s914 = scalar_lea.vmem [#allocation2], %s913
        %s915 = smul.u32 16, %s21
        %p916 = scmp.lt.s32.totalorder %s915, 31
        %s917 = scalar_select %p916, %s915, 31
        %s918 = smul.addr %s917, 8
        %s919 = scalar_lea.vmem %s6, %s918
        // Predicated region
        $region41: #{tpu_custom_call.1} parent=39 // pred_check
          %p920 = pneg %p149
        $region42: #{tpu_custom_call.1} parent=39 // pred_check_branch
          %922 = sbr.rel (%p920) target = $region44
        $region43: #{tpu_custom_call.1} parent=39 // pred_region
          %s923 = smul.u32 16, %s21
          %s925 = ssub.s32 2048, 2048
          %926 = vsyncadd %s911, %s925
          %s927 = smul.addr %s923, 128
          %s928 = scalar_lea.hbm %s5, %s927
          %s929 = sshll.u32 %s914, 4
          %s930 = int_to_ptr.vmem [resolvable:$true] %s929
          %935 = dma.vmem_to_hbm [thread:$0]  %s930, 2048, %s928, %s911, 128, 128, 8
        $region44: #{tpu_custom_call.1} parent=39 // pred_fallthru
          _
        // Predicated region
        $region45: #{tpu_custom_call.1} parent=39 // pred_check
          %p936 = pneg %p175
        $region46: #{tpu_custom_call.1} parent=39 // pred_check_branch
          %938 = sbr.rel (%p936) target = $region48
        $region47: #{tpu_custom_call.1} parent=39 // pred_region
          %s939 = smul.u32 16, %s21
        $region48: #{tpu_custom_call.1} parent=39 // pred_fallthru
          _
      $region40: #{tpu_custom_call.1} parent=5 // pred_fallthru
        _
      %p940 = scmp.le.s32.totalorder 2, %s16
      // Predicated region
      $region49: #{tpu_custom_call.1} parent=5 // pred_check
        %p941 = pneg %p940
      $region50: #{tpu_custom_call.1} parent=5 // pred_check_branch
        %943 = sbr.rel (%p941) target = $region52
      $region51: #{tpu_custom_call.1} parent=5 // pred_region
        %s944 = ssub.s32 %s16, 2
        // Predicated region
        $region53: #{tpu_custom_call.1} parent=51 // pred_check
          %p945 = pneg %p155
        $region54: #{tpu_custom_call.1} parent=51 // pred_check_branch
          %947 = sbr.rel (%p945) target = $region56
        $region55: #{tpu_custom_call.1} parent=51 // pred_region
          %s948 = sand.u32 %s140, 1
          %s949 = scalar_lea.sflag [#allocation3], %s948
          %s950 = sand.u32 %s140, 1
          %s951 = smul.addr %s950, 128
          %s952 = scalar_lea.vmem [#allocation2], %s951
          %953 = dma.done %s949, 2048
        $region56: #{tpu_custom_call.1} parent=51 // pred_fallthru
          _
        // Predicated region
        $region57: #{tpu_custom_call.1} parent=51 // pred_check
          %p954 = pneg %p181
        $region58: #{tpu_custom_call.1} parent=51 // pred_check_branch
          %956 = sbr.rel (%p954) target = $region60
        $region59: #{tpu_custom_call.1} parent=51 // pred_region
          %s957 = smul.u32 16, %s22
          %p958 = scmp.lt.s32.totalorder %s957, 31
          %s959 = scalar_select %p958, %s957, 31
          %s960 = smul.addr %s959, 8
          %s961 = scalar_lea.vmem %s6, %s960
        $region60: #{tpu_custom_call.1} parent=51 // pred_fallthru
          _
      $region52: #{tpu_custom_call.1} parent=5 // pred_fallthru
        _
    $region6: #{tpu_custom_call.1} parent=1 // loop_footer
      %s20 = sadd.s32 1, %s16
    $region7: #{tpu_custom_call.1} parent=1 // loop_footer_branch
      %15 = sbr.rel target = $region3
    $region8: #{tpu_custom_call.1} parent=1 // loop_exit
      _
    %962 = vsyncpa [#allocation3], 1
    %s963 = scalar_lea.sflag [#allocation3], 1
    %964 = vsyncpa %s963, 1

</llo_original>
